<compile_context>
chip_gen: v7x
topology: tpu7x:2x2x1
jax: 0.10.0
libtpu: 0.0.40
codegen_flags: <defaults>
</compile_context>

<pallas_src>
import jax
import jax.numpy as jnp
from jax import lax
from jax.experimental import pallas as pl
from jax.experimental.pallas import tpu as pltpu

# ----------------------------- sizes -----------------------------
VOCAB = 128      # vocab_size
EMB   = 32       # embed_dim
HID   = 32       # hidden_units
B     = 4        # batch
S     = 8        # encoder sequence length
DTYPE = jnp.float32


# ----------------------------- kernel -----------------------------
def decoder_kernel(ids_ref, emb_ref, h_ref, c_ref, enc_ref,
                   wch_ref, wce_ref, bc_ref, ws_ref,
                   wl_ref, bl_ref, wfc_ref, bfc_ref,
                   logits_ref, hc_ref):
    h   = h_ref[0]        # (B, H)     previous hidden state (native (1,B,H), squeeze layer dim)
    c   = c_ref[0]        # (B, H)     previous cell state
    enc = enc_ref[...]    # (B*S, 2H)  encoder outputs, flat rows

    Bb, Hd = h.shape
    BS, F2 = enc.shape
    Ss = BS // Bb
    Vv, Ed = emb_ref.shape

    # ---------------- in-kernel embedding gather (eval-mode dropout = identity) ----------------
    # one-hot (B, VOCAB) @ (VOCAB, EMB) MXU contraction == exact row gather; removes the XLA
    # gather op and the HBM roundtrip for the embedded tokens.
    ids = ids_ref[...]                                                     # (B, 1) int32
    onehot = (ids == lax.broadcasted_iota(jnp.int32, (Bb, Vv), 1)).astype(jnp.float32)
    x = jnp.dot(onehot, emb_ref[...], preferred_element_type=jnp.float32)  # (B, E)

    # ---------------- AttentionNetwork, flat over all B*S rows ----------------
    # combined = cat([h repeated over S, enc], -1); energy = tanh(Linear(3H->H)(combined))
    # weight split into h-part / enc-part avoids the concat; enc part is ONE (B*S,2H)@(2H,H) push.
    e_part = jnp.dot(enc, wce_ref[...], preferred_element_type=jnp.float32)              # (B*S, H)
    h_pb   = jnp.dot(h, wch_ref[...], preferred_element_type=jnp.float32) + bc_ref[...]  # (B, H)

    # replicate each batch's h-part over its S contiguous rows (sublane broadcasts, no reshape)
    h_rep = jnp.concatenate(
        [jnp.broadcast_to(h_pb[b:b + 1, :], (Ss, Hd)) for b in range(Bb)], axis=0)       # (B*S, H)

    energy = jnp.tanh(e_part + h_rep)                                                    # (B*S, H)
    scores = jnp.sum(energy * ws_ref[...], axis=-1, keepdims=True)                       # (B*S, 1)

    # exp once at full width; a single global max shift is valid (softmax is shift-invariant
    # per group) and numerically safe since |scores| <= ||w_score||_1 (|tanh| <= 1).
    ex = jnp.exp(scores - jnp.max(scores, axis=0, keepdims=True))                        # (B*S, 1)

    # per-batch softmax normalization + context, unrolled over B with static 8-row slices
    ctx_rows = []
    for b in range(Bb):
        ex_b  = ex[b * Ss:(b + 1) * Ss, :]                        # (S, 1)
        enc_b = enc[b * Ss:(b + 1) * Ss, :]                       # (S, 2H)
        num_b = jnp.sum(ex_b * enc_b, axis=0, keepdims=True)      # (1, 2H)
        den_b = jnp.sum(ex_b, axis=0, keepdims=True)              # (1, 1)
        ctx_rows.append(num_b / den_b)
    context = jnp.concatenate(ctx_rows, axis=0)                   # (B, 2H)

    # ---------------- fused single LSTM step (num_layers=1) ----------------
    # pack [x | context | h] in registers -> (B, E+2H+H) = (B, 128); one K=128 matmul for all gates
    lstm_in = jnp.concatenate([x, context, h], axis=-1)                                   # (B, 128)
    gates = (jnp.dot(lstm_in, wl_ref[...], preferred_element_type=jnp.float32)
             + bl_ref[...])                                                               # (B, 4H)

    sg = jax.nn.sigmoid(gates)          # full-width EUP push, i/f/o sliced out below
    th = jnp.tanh(gates)                # full-width EUP push, g sliced out below
    i_g = sg[:, 0 * Hd:1 * Hd]
    f_g = sg[:, 1 * Hd:2 * Hd]
    g_g = th[:, 2 * Hd:3 * Hd]
    o_g = sg[:, 3 * Hd:4 * Hd]

    c_new = f_g * c + i_g * g_g
    h_new = o_g * jnp.tanh(c_new)

    # ---------------- fc: Linear(H -> vocab), lane-dense (B, V) ----------------
    logits = jnp.dot(h_new, wfc_ref[...], preferred_element_type=jnp.float32) + bfc_ref[...]

    logits_ref[:, 0, :] = logits.astype(logits_ref.dtype)      # (B, 1, V) single lane-dense block
    hc_ref[0] = h_new.astype(hc_ref.dtype)                     # fused (2, B, H) state output:
    hc_ref[1] = c_new.astype(hc_ref.dtype)                     #   [0]=ht, [1]=ct (one writeback)


# ----------------------------- wrapper -----------------------------
def lstm_attn_decoder(x_ids, h_c, encoder_out, params):
    """Mirrors LSTMAttnDecoder.forward (eval mode).

    x_ids: (B,) int32 token ids
    h_c: (h0, c0) each (1, B, H)
    encoder_out: (B, S, 2H)
    returns: (logits (B,1,V), (ht (1,B,H), ct (1,B,H)))
    """
    h0, c0 = h_c
    Bsz = x_ids.shape[0]
    Ssz = encoder_out.shape[1]
    F2 = encoder_out.shape[2]

    ids2d = x_ids.reshape(Bsz, 1).astype(jnp.int32)          # (B, 1) for in-kernel one-hot gather
    enc_flat = encoder_out.reshape(Bsz * Ssz, F2)            # free XLA reshape of contiguous array

    vmem = pl.BlockSpec(memory_space=pltpu.MemorySpace.VMEM)

    out_shape = (
        jax.ShapeDtypeStruct((Bsz, 1, VOCAB), DTYPE),        # logits
        jax.ShapeDtypeStruct((2, Bsz, HID), DTYPE),          # fused [ht; ct]
    )

    logits, hc = pl.pallas_call(
        decoder_kernel,
        out_shape=out_shape,
        in_specs=[vmem] * 13,
        out_specs=(vmem, vmem),
    )(
        ids2d, params["embedding"], h0, c0, enc_flat,
        params["w_comb_h"], params["w_comb_e"], params["b_comb"], params["w_score"],
        params["w_lstm"], params["b_lstm"], params["w_fc"], params["b_fc"],
    )
    ht = hc[0:1]                                             # (1, B, H)
    ct = hc[1:2]                                             # (1, B, H)
    return logits, (ht, ct)


# ----------------------------- pure-JAX reference -----------------------------
def reference_forward(x_ids, h_c, encoder_out, params):
    h0, c0 = h_c
    x = params["embedding"][x_ids][:, None, :]                          # (B, 1, E)

    # AttentionNetwork
    dec_h = jnp.transpose(h0, (1, 0, 2))                                # (B, 1, H)
    dec_h = jnp.broadcast_to(dec_h, (x.shape[0], encoder_out.shape[1], HID))
    combined = jnp.concatenate([dec_h, encoder_out], axis=2)            # (B, S, 3H)
    w_comb = jnp.concatenate([params["w_comb_h"], params["w_comb_e"]], axis=0)  # (3H, H)
    energy = jnp.tanh(combined @ w_comb + params["b_comb"])             # (B, S, H)
    scores = jnp.einsum("bsh,h->bs", energy, params["w_score"][0])
    attn = jax.nn.softmax(scores, axis=1)[:, None, :]                   # (B, 1, S)
    context = attn @ encoder_out                                        # (B, 1, 2H)

    # LSTM single step (fused weight split back into W_ih / W_hh parts)
    xin = jnp.concatenate([x, context], axis=2)[:, 0, :]                # (B, E+2H)
    w_ih = params["w_lstm"][:EMB + 2 * HID]                             # (E+2H, 4H)
    w_hh = params["w_lstm"][EMB + 2 * HID:]                             # (H, 4H)
    gates = xin @ w_ih + h0[0] @ w_hh + params["b_lstm"][0]             # (B, 4H)
    i_g = jax.nn.sigmoid(gates[:, :HID])
    f_g = jax.nn.sigmoid(gates[:, HID:2 * HID])
    g_g = jnp.tanh(gates[:, 2 * HID:3 * HID])
    o_g = jax.nn.sigmoid(gates[:, 3 * HID:])
    c_new = f_g * c0[0] + i_g * g_g
    h_new = o_g * jnp.tanh(c_new)

    logits = h_new @ params["w_fc"] + params["b_fc"][0]                 # (B, V)
    return logits[:, None, :], (h_new[None], c_new[None])


# ----------------------------- params + main -----------------------------
def make_params(key):
    ks = jax.random.split(key, 9)
    scale = 0.1
    emb = scale * jax.random.normal(ks[0], (VOCAB, EMB), DTYPE)
    emb = emb.at[0].set(0.0)  # padding_idx=0
    return {
        "embedding": emb,
        # attention: attn_combine Linear(3H -> H) split into h-part / enc-part (stored transposed)
        "w_comb_h": scale * jax.random.normal(ks[1], (HID, HID), DTYPE),
        "w_comb_e": scale * jax.random.normal(ks[2], (2 * HID, HID), DTYPE),
        "b_comb":   scale * jax.random.normal(ks[3], (1, HID), DTYPE),
        # score_layer Linear(H -> 1, bias=False)
        "w_score":  scale * jax.random.normal(ks[4], (1, HID), DTYPE),
        # fused LSTM weight, rows ordered [x (E) | context (2H) | h (H)] -> (E+3H, 4H) = (128,128),
        # gate order [i, f, g, o]; bias = b_ih + b_hh folded together.
        "w_lstm":   scale * jax.random.normal(ks[5], (EMB + 3 * HID, 4 * HID), DTYPE),
        "b_lstm":   scale * jax.random.normal(ks[6], (1, 4 * HID), DTYPE),
        # fc Linear(H -> vocab), stored transposed
        "w_fc":     scale * jax.random.normal(ks[7], (HID, VOCAB), DTYPE),
        "b_fc":     jnp.zeros((1, VOCAB), DTYPE),
    }


if __name__ == "__main__":
    key = jax.random.PRNGKey(0)
    k_par, k_x, k_h, k_c, k_enc = jax.random.split(key, 5)

    params = make_params(k_par)
    x_ids = jax.random.randint(k_x, (B,), 1, VOCAB, dtype=jnp.int32)
    h0 = jax.random.normal(k_h, (1, B, HID), DTYPE)
    c0 = jax.random.normal(k_c, (1, B, HID), DTYPE)
    encoder_out = jax.random.normal(k_enc, (B, S, 2 * HID), DTYPE)

    logits, (ht, ct) = jax.jit(lstm_attn_decoder)(x_ids, (h0, c0), encoder_out, params)
    jax.block_until_ready((logits, ht, ct))

    # correctness check against pure-JAX reference of the PyTorch forward
    ref_logits, (ref_ht, ref_ct) = reference_forward(x_ids, (h0, c0), encoder_out, params)
    assert logits.shape == (B, 1, VOCAB) and ht.shape == (1, B, HID) and ct.shape == (1, B, HID)
    assert jnp.allclose(logits, ref_logits, atol=1e-5, rtol=1e-5)
    assert jnp.allclose(ht, ref_ht, atol=1e-5, rtol=1e-5)
    assert jnp.allclose(ct, ref_ct, atol=1e-5, rtol=1e-5)

    print("KERNEL_OK")
</pallas_src>

<mosaic_0001>
module attributes {stable_mosaic.version = 11 : i64} {
  func.func @decoder_kernel(%arg0: memref<4x1xi32, #tpu.memory_space<vmem>>, %arg1: memref<128x32xf32, #tpu.memory_space<vmem>>, %arg2: memref<1x4x32xf32, #tpu.memory_space<vmem>>, %arg3: memref<1x4x32xf32, #tpu.memory_space<vmem>>, %arg4: memref<32x64xf32, #tpu.memory_space<vmem>>, %arg5: memref<32x32xf32, #tpu.memory_space<vmem>>, %arg6: memref<64x32xf32, #tpu.memory_space<vmem>>, %arg7: memref<1x32xf32, #tpu.memory_space<vmem>>, %arg8: memref<1x32xf32, #tpu.memory_space<vmem>>, %arg9: memref<128x128xf32, #tpu.memory_space<vmem>>, %arg10: memref<1x128xf32, #tpu.memory_space<vmem>>, %arg11: memref<32x128xf32, #tpu.memory_space<vmem>>, %arg12: memref<1x128xf32, #tpu.memory_space<vmem>>, %arg13: memref<4x1x128xf32, #tpu.memory_space<vmem>>, %arg14: memref<2x4x32xf32, #tpu.memory_space<vmem>>) attributes {dimension_semantics = [], scalar_prefetch = 0 : i64, scratch_operands = 0 : i64, tpu.core_type = #tpu.core_type<tc>} {
    %c0 = arith.constant 0 : index
    %c0_0 = arith.constant 0 : index
    %c0_1 = arith.constant 0 : index
    %0 = vector.load %arg2[%c0, %c0_0, %c0_1] : memref<1x4x32xf32, #tpu.memory_space<vmem>>, vector<1x4x32xf32>
    %1 = vector.shape_cast %0 : vector<1x4x32xf32> to vector<4x32xf32>
    %c0_2 = arith.constant 0 : index
    %c0_3 = arith.constant 0 : index
    %c0_4 = arith.constant 0 : index
    %2 = vector.load %arg3[%c0_2, %c0_3, %c0_4] : memref<1x4x32xf32, #tpu.memory_space<vmem>>, vector<1x4x32xf32>
    %3 = vector.shape_cast %2 : vector<1x4x32xf32> to vector<4x32xf32>
    %c0_5 = arith.constant 0 : index
    %c0_6 = arith.constant 0 : index
    %4 = vector.load %arg4[%c0_5, %c0_6] : memref<32x64xf32, #tpu.memory_space<vmem>>, vector<32x64xf32>
    %c0_7 = arith.constant 0 : index
    %c0_8 = arith.constant 0 : index
    %5 = vector.load %arg0[%c0_7, %c0_8] : memref<4x1xi32, #tpu.memory_space<vmem>>, vector<4x1xi32>
    %6 = tpu.iota {dimensions = array<i32: 1>} : vector<4x128xi32>
    %7 = vector.broadcast %5 : vector<4x1xi32> to vector<4x128xi32>
    %8 = arith.cmpi eq, %7, %6 : vector<4x128xi32>
    %9 = arith.extui %8 : vector<4x128xi1> to vector<4x128xi32>
    %10 = arith.sitofp %9 : vector<4x128xi32> to vector<4x128xf32>
    %c0_9 = arith.constant 0 : index
    %c0_10 = arith.constant 0 : index
    %11 = vector.load %arg1[%c0_9, %c0_10] : memref<128x32xf32, #tpu.memory_space<vmem>>, vector<128x32xf32>
    %cst = arith.constant dense<0.000000e+00> : vector<4x32xf32>
    %12 = tpu.matmul %10, %11, %cst {dimension_numbers = #tpu.dot_dimension_numbers<[1], [0], [0], [1], [0, 0, 1, 1], [], []>} : vector<4x128xf32>, vector<128x32xf32>, vector<4x32xf32> -> vector<4x32xf32>
    %c0_11 = arith.constant 0 : index
    %c0_12 = arith.constant 0 : index
    %13 = vector.load %arg6[%c0_11, %c0_12] : memref<64x32xf32, #tpu.memory_space<vmem>>, vector<64x32xf32>
    %cst_13 = arith.constant dense<0.000000e+00> : vector<32x32xf32>
    %14 = tpu.matmul %4, %13, %cst_13 {dimension_numbers = #tpu.dot_dimension_numbers<[1], [0], [0], [1], [0, 0, 1, 1], [], []>} : vector<32x64xf32>, vector<64x32xf32>, vector<32x32xf32> -> vector<32x32xf32>
    %c0_14 = arith.constant 0 : index
    %c0_15 = arith.constant 0 : index
    %15 = vector.load %arg5[%c0_14, %c0_15] : memref<32x32xf32, #tpu.memory_space<vmem>>, vector<32x32xf32>
    %cst_16 = arith.constant dense<0.000000e+00> : vector<4x32xf32>
    %16 = tpu.matmul %1, %15, %cst_16 {dimension_numbers = #tpu.dot_dimension_numbers<[1], [0], [0], [1], [0, 0, 1, 1], [], []>} : vector<4x32xf32>, vector<32x32xf32>, vector<4x32xf32> -> vector<4x32xf32>
    %c0_17 = arith.constant 0 : index
    %c0_18 = arith.constant 0 : index
    %17 = vector.load %arg7[%c0_17, %c0_18] : memref<1x32xf32, #tpu.memory_space<vmem>>, vector<1x32xf32>
    %18 = vector.broadcast %17 : vector<1x32xf32> to vector<4x32xf32>
    %19 = arith.addf %16, %18 : vector<4x32xf32>
    %20 = vector.extract_strided_slice %19 {offsets = [0, 0], sizes = [1, 32], strides = [1, 1]} : vector<4x32xf32> to vector<1x32xf32>
    %21 = vector.shape_cast %20 : vector<1x32xf32> to vector<1x32xf32>
    %22 = vector.broadcast %21 : vector<1x32xf32> to vector<8x32xf32>
    %23 = vector.extract_strided_slice %19 {offsets = [1, 0], sizes = [1, 32], strides = [1, 1]} : vector<4x32xf32> to vector<1x32xf32>
    %24 = vector.shape_cast %23 : vector<1x32xf32> to vector<1x32xf32>
    %25 = vector.broadcast %24 : vector<1x32xf32> to vector<8x32xf32>
    %26 = vector.extract_strided_slice %19 {offsets = [2, 0], sizes = [1, 32], strides = [1, 1]} : vector<4x32xf32> to vector<1x32xf32>
    %27 = vector.shape_cast %26 : vector<1x32xf32> to vector<1x32xf32>
    %28 = vector.broadcast %27 : vector<1x32xf32> to vector<8x32xf32>
    %29 = vector.extract_strided_slice %19 {offsets = [3, 0], sizes = [1, 32], strides = [1, 1]} : vector<4x32xf32> to vector<1x32xf32>
    %30 = vector.shape_cast %29 : vector<1x32xf32> to vector<1x32xf32>
    %31 = vector.broadcast %30 : vector<1x32xf32> to vector<8x32xf32>
    %32 = tpu.concatenate %22, %25, %28, %31 in 0 : vector<8x32xf32>, vector<8x32xf32>, vector<8x32xf32>, vector<8x32xf32> -> vector<32x32xf32>
    %33 = arith.addf %14, %32 : vector<32x32xf32>
    %34 = math.tanh %33 : vector<32x32xf32>
    %c0_19 = arith.constant 0 : index
    %c0_20 = arith.constant 0 : index
    %35 = vector.load %arg8[%c0_19, %c0_20] : memref<1x32xf32, #tpu.memory_space<vmem>>, vector<1x32xf32>
    %36 = vector.broadcast %35 : vector<1x32xf32> to vector<32x32xf32>
    %37 = arith.mulf %34, %36 : vector<32x32xf32>
    %cst_21 = arith.constant dense<0.000000e+00> : vector<32xf32>
    %38 = vector.multi_reduction <add>, %37, %cst_21 [1] : vector<32x32xf32> to vector<32xf32>
    %39 = vector.shape_cast %38 : vector<32xf32> to vector<32x1xf32>
    %cst_22 = arith.constant dense<0xFF800000> : vector<1xf32>
    %40 = vector.multi_reduction <maximumf>, %39, %cst_22 [0] : vector<32x1xf32> to vector<1xf32>
    %41 = vector.shape_cast %40 : vector<1xf32> to vector<1x1xf32>
    %42 = vector.broadcast %41 : vector<1x1xf32> to vector<32x1xf32>
    %43 = arith.subf %39, %42 : vector<32x1xf32>
    %44 = math.exp %43 : vector<32x1xf32>
    %45 = vector.extract_strided_slice %44 {offsets = [0, 0], sizes = [8, 1], strides = [1, 1]} : vector<32x1xf32> to vector<8x1xf32>
    %46 = vector.extract_strided_slice %4 {offsets = [0, 0], sizes = [8, 64], strides = [1, 1]} : vector<32x64xf32> to vector<8x64xf32>
    %47 = vector.broadcast %45 : vector<8x1xf32> to vector<8x64xf32>
    %48 = arith.mulf %47, %46 : vector<8x64xf32>
    %cst_23 = arith.constant dense<0.000000e+00> : vector<64xf32>
    %49 = vector.multi_reduction <add>, %48, %cst_23 [0] : vector<8x64xf32> to vector<64xf32>
    %50 = vector.shape_cast %49 : vector<64xf32> to vector<1x64xf32>
    %cst_24 = arith.constant dense<0.000000e+00> : vector<1xf32>
    %51 = vector.multi_reduction <add>, %45, %cst_24 [0] : vector<8x1xf32> to vector<1xf32>
    %52 = vector.shape_cast %51 : vector<1xf32> to vector<1x1xf32>
    %53 = vector.broadcast %52 : vector<1x1xf32> to vector<1x64xf32>
    %54 = arith.divf %50, %53 : vector<1x64xf32>
    %55 = vector.extract_strided_slice %44 {offsets = [8, 0], sizes = [8, 1], strides = [1, 1]} : vector<32x1xf32> to vector<8x1xf32>
    %56 = vector.extract_strided_slice %4 {offsets = [8, 0], sizes = [8, 64], strides = [1, 1]} : vector<32x64xf32> to vector<8x64xf32>
    %57 = vector.broadcast %55 : vector<8x1xf32> to vector<8x64xf32>
    %58 = arith.mulf %57, %56 : vector<8x64xf32>
    %cst_25 = arith.constant dense<0.000000e+00> : vector<64xf32>
    %59 = vector.multi_reduction <add>, %58, %cst_25 [0] : vector<8x64xf32> to vector<64xf32>
    %60 = vector.shape_cast %59 : vector<64xf32> to vector<1x64xf32>
    %cst_26 = arith.constant dense<0.000000e+00> : vector<1xf32>
    %61 = vector.multi_reduction <add>, %55, %cst_26 [0] : vector<8x1xf32> to vector<1xf32>
    %62 = vector.shape_cast %61 : vector<1xf32> to vector<1x1xf32>
    %63 = vector.broadcast %62 : vector<1x1xf32> to vector<1x64xf32>
    %64 = arith.divf %60, %63 : vector<1x64xf32>
    %65 = vector.extract_strided_slice %44 {offsets = [16, 0], sizes = [8, 1], strides = [1, 1]} : vector<32x1xf32> to vector<8x1xf32>
    %66 = vector.extract_strided_slice %4 {offsets = [16, 0], sizes = [8, 64], strides = [1, 1]} : vector<32x64xf32> to vector<8x64xf32>
    %67 = vector.broadcast %65 : vector<8x1xf32> to vector<8x64xf32>
    %68 = arith.mulf %67, %66 : vector<8x64xf32>
    %cst_27 = arith.constant dense<0.000000e+00> : vector<64xf32>
    %69 = vector.multi_reduction <add>, %68, %cst_27 [0] : vector<8x64xf32> to vector<64xf32>
    %70 = vector.shape_cast %69 : vector<64xf32> to vector<1x64xf32>
    %cst_28 = arith.constant dense<0.000000e+00> : vector<1xf32>
    %71 = vector.multi_reduction <add>, %65, %cst_28 [0] : vector<8x1xf32> to vector<1xf32>
    %72 = vector.shape_cast %71 : vector<1xf32> to vector<1x1xf32>
    %73 = vector.broadcast %72 : vector<1x1xf32> to vector<1x64xf32>
    %74 = arith.divf %70, %73 : vector<1x64xf32>
    %75 = vector.extract_strided_slice %44 {offsets = [24, 0], sizes = [8, 1], strides = [1, 1]} : vector<32x1xf32> to vector<8x1xf32>
    %76 = vector.extract_strided_slice %4 {offsets = [24, 0], sizes = [8, 64], strides = [1, 1]} : vector<32x64xf32> to vector<8x64xf32>
    %77 = vector.broadcast %75 : vector<8x1xf32> to vector<8x64xf32>
    %78 = arith.mulf %77, %76 : vector<8x64xf32>
    %cst_29 = arith.constant dense<0.000000e+00> : vector<64xf32>
    %79 = vector.multi_reduction <add>, %78, %cst_29 [0] : vector<8x64xf32> to vector<64xf32>
    %80 = vector.shape_cast %79 : vector<64xf32> to vector<1x64xf32>
    %cst_30 = arith.constant dense<0.000000e+00> : vector<1xf32>
    %81 = vector.multi_reduction <add>, %75, %cst_30 [0] : vector<8x1xf32> to vector<1xf32>
    %82 = vector.shape_cast %81 : vector<1xf32> to vector<1x1xf32>
    %83 = vector.broadcast %82 : vector<1x1xf32> to vector<1x64xf32>
    %84 = arith.divf %80, %83 : vector<1x64xf32>
    %85 = tpu.concatenate %54, %64, %74, %84 in 0 : vector<1x64xf32>, vector<1x64xf32>, vector<1x64xf32>, vector<1x64xf32> -> vector<4x64xf32>
    %86 = tpu.concatenate %12, %85, %1 in 1 : vector<4x32xf32>, vector<4x64xf32>, vector<4x32xf32> -> vector<4x128xf32>
    %c0_31 = arith.constant 0 : index
    %c0_32 = arith.constant 0 : index
    %87 = vector.load %arg9[%c0_31, %c0_32] : memref<128x128xf32, #tpu.memory_space<vmem>>, vector<128x128xf32>
    %cst_33 = arith.constant dense<0.000000e+00> : vector<4x128xf32>
    %88 = tpu.matmul %86, %87, %cst_33 {dimension_numbers = #tpu.dot_dimension_numbers<[1], [0], [0], [1], [0, 0, 1, 1], [], []>} : vector<4x128xf32>, vector<128x128xf32>, vector<4x128xf32> -> vector<4x128xf32>
    %c0_34 = arith.constant 0 : index
    %c0_35 = arith.constant 0 : index
    %89 = vector.load %arg10[%c0_34, %c0_35] : memref<1x128xf32, #tpu.memory_space<vmem>>, vector<1x128xf32>
    %90 = vector.broadcast %89 : vector<1x128xf32> to vector<4x128xf32>
    %91 = arith.addf %88, %90 : vector<4x128xf32>
    %92 = arith.negf %91 : vector<4x128xf32>
    %93 = math.exp %92 : vector<4x128xf32>
    %cst_36 = arith.constant 1.000000e+00 : f32
    %94 = vector.broadcast %cst_36 : f32 to vector<4x128xf32>
    %95 = arith.addf %94, %93 : vector<4x128xf32>
    %96 = arith.divf %94, %95 : vector<4x128xf32>
    %97 = math.tanh %91 : vector<4x128xf32>
    %98 = vector.extract_strided_slice %96 {offsets = [0, 0], sizes = [4, 32], strides = [1, 1]} : vector<4x128xf32> to vector<4x32xf32>
    %99 = vector.extract_strided_slice %96 {offsets = [0, 32], sizes = [4, 32], strides = [1, 1]} : vector<4x128xf32> to vector<4x32xf32>
    %100 = vector.extract_strided_slice %97 {offsets = [0, 64], sizes = [4, 32], strides = [1, 1]} : vector<4x128xf32> to vector<4x32xf32>
    %101 = vector.extract_strided_slice %96 {offsets = [0, 96], sizes = [4, 32], strides = [1, 1]} : vector<4x128xf32> to vector<4x32xf32>
    %102 = arith.mulf %99, %3 : vector<4x32xf32>
    %103 = arith.mulf %98, %100 : vector<4x32xf32>
    %104 = arith.addf %102, %103 : vector<4x32xf32>
    %105 = math.tanh %104 : vector<4x32xf32>
    %106 = arith.mulf %101, %105 : vector<4x32xf32>
    %c0_37 = arith.constant 0 : index
    %c0_38 = arith.constant 0 : index
    %107 = vector.load %arg11[%c0_37, %c0_38] : memref<32x128xf32, #tpu.memory_space<vmem>>, vector<32x128xf32>
    %cst_39 = arith.constant dense<0.000000e+00> : vector<4x128xf32>
    %108 = tpu.matmul %106, %107, %cst_39 {dimension_numbers = #tpu.dot_dimension_numbers<[1], [0], [0], [1], [0, 0, 1, 1], [], []>} : vector<4x32xf32>, vector<32x128xf32>, vector<4x128xf32> -> vector<4x128xf32>
    %c0_40 = arith.constant 0 : index
    %c0_41 = arith.constant 0 : index
    %109 = vector.load %arg12[%c0_40, %c0_41] : memref<1x128xf32, #tpu.memory_space<vmem>>, vector<1x128xf32>
    %110 = vector.broadcast %109 : vector<1x128xf32> to vector<4x128xf32>
    %111 = arith.addf %108, %110 : vector<4x128xf32>
    %c0_42 = arith.constant 0 : index
    %c0_43 = arith.constant 0 : index
    %c0_44 = arith.constant 0 : index
    %112 = vector.load %arg13[%c0_42, %c0_43, %c0_44] : memref<4x1x128xf32, #tpu.memory_space<vmem>>, vector<4x1x128xf32>
    %113 = vector.shape_cast %112 : vector<4x1x128xf32> to vector<4x128xf32>
    %114 = vector.shape_cast %111 : vector<4x128xf32> to vector<4x1x128xf32>
    tpu.vector_store %arg13[%c0_42, %c0_43, %c0_44], %114 {strides = array<i32>} : memref<4x1x128xf32, #tpu.memory_space<vmem>>, vector<4x1x128xf32>,
    %c0_45 = arith.constant 0 : index
    %c0_46 = arith.constant 0 : index
    %c0_47 = arith.constant 0 : index
    %115 = vector.load %arg14[%c0_45, %c0_46, %c0_47] : memref<2x4x32xf32, #tpu.memory_space<vmem>>, vector<1x4x32xf32>
    %116 = vector.shape_cast %115 : vector<1x4x32xf32> to vector<4x32xf32>
    %117 = vector.shape_cast %106 : vector<4x32xf32> to vector<1x4x32xf32>
    tpu.vector_store %arg14[%c0_45, %c0_46, %c0_47], %117 {strides = array<i32>} : memref<2x4x32xf32, #tpu.memory_space<vmem>>, vector<1x4x32xf32>,
    %c1 = arith.constant 1 : index
    %c0_48 = arith.constant 0 : index
    %c0_49 = arith.constant 0 : index
    %118 = vector.load %arg14[%c1, %c0_48, %c0_49] : memref<2x4x32xf32, #tpu.memory_space<vmem>>, vector<1x4x32xf32>
    %119 = vector.shape_cast %118 : vector<1x4x32xf32> to vector<4x32xf32>
    %120 = vector.shape_cast %104 : vector<4x32xf32> to vector<1x4x32xf32>
    tpu.vector_store %arg14[%c1, %c0_48, %c0_49], %120 {strides = array<i32>} : memref<2x4x32xf32, #tpu.memory_space<vmem>>, vector<1x4x32xf32>,
    return
  }
}

</mosaic_0001>

<llo_original>
// kernel: lstm_attn_decoder.1
$region0: #{lstm_attn_decoder.1}
  #allocation0 [shape = 'u32[]', space=smem, size = 0x4, offset = 0x4, fixed_abs, tag = 'smem constant byte address 0x4 - core index']
  #allocation1 [shape = 'u32[144,128]{1,0:T(1,128)}', space=vmem, size = 0x12000, scoped, tag = 'internal scratch']
  %s0 = inlined_call_operand.vmem [shape: s32[4,1], index: 0, kind: input, shape index: {}]
  %s1 = inlined_call_operand.vmem [shape: f32[128,32], index: 1, kind: input, shape index: {}]
  %s2 = inlined_call_operand.vmem [shape: f32[1,4,32], index: 2, kind: input, shape index: {}]
  %s3 = inlined_call_operand.vmem [shape: f32[1,4,32], index: 3, kind: input, shape index: {}]
  %s4 = inlined_call_operand.vmem [shape: f32[32,64], index: 4, kind: input, shape index: {}]
  %s5 = inlined_call_operand.vmem [shape: f32[32,32], index: 5, kind: input, shape index: {}]
  %s6 = inlined_call_operand.vmem [shape: f32[64,32], index: 6, kind: input, shape index: {}]
  %s7 = inlined_call_operand.vmem [shape: f32[1,32], index: 7, kind: input, shape index: {}]
  %s8 = inlined_call_operand.vmem [shape: f32[1,32], index: 8, kind: input, shape index: {}]
  %s9 = inlined_call_operand.vmem [shape: f32[128,128], index: 9, kind: input, shape index: {}]
  %s10 = inlined_call_operand.hbm [shape: f32[1,128], index: 10, kind: input, shape index: {}]
  %s11 = inlined_call_operand.vmem [shape: f32[32,128], index: 11, kind: input, shape index: {}]
  %s12 = inlined_call_operand.hbm [shape: f32[1,128], index: 12, kind: input, shape index: {}]
  %s13 = inlined_call_operand.hbm [shape: f32[4,1,128], index: 13, kind: output, shape index: {0}]
  %s14 = inlined_call_operand.vmem [shape: f32[2,4,32], index: 14, kind: output, shape index: {1}]
  %15 = xla_tuple %s13, %s14
  %s16 = sld [smem:[#allocation0]]
  $region78: #{lstm_attn_decoder.1} parent=0
    _
  %s18 = ssub.s32 1, %s16
  %s19 = scalar_select 0, %s18, %s16
  $region1: #{lstm_attn_decoder.1} parent=0
    #allocation2 [shape = 'u8[512]{0}', space=vmem, size = 0x400, scoped, tag = 'input window, operand 10, single buffered']
    #allocation3 [shape = 's32[1]{0}', space=sflag, size = 0x4, scoped, tag = 'scoped memory for lstm_attn_decoder.1']
    #allocation4 [shape = 's32[1]{0}', space=sflag, size = 0x4, scoped, tag = 'scoped memory for lstm_attn_decoder.1']
    #allocation5 [shape = 'u8[512]{0}', space=vmem, size = 0x400, scoped, tag = 'input window, operand 12, single buffered']
    #allocation6 [shape = 's32[1]{0}', space=sflag, size = 0x4, scoped, tag = 'scoped memory for lstm_attn_decoder.1']
    #allocation7 [shape = 'u8[2048]{0}', space=vmem, size = 0x800, scoped, tag = 'output window, operand 0, single buffered']
    %20 = vsyncpa [#allocation3], 0
    %21 = vsyncpa [#allocation6], 0
    %22 = vsyncpa [#allocation4], 0
    // Predicated region
    $region2: #{lstm_attn_decoder.1} parent=1 // pred_check
      _
    $region3: #{lstm_attn_decoder.1} parent=1 // pred_check_branch
      %24 = sbr.rel (0) target = $region5
    $region4: #{lstm_attn_decoder.1} parent=1 // pred_region
      _
    $region5: #{lstm_attn_decoder.1} parent=1 // pred_fallthru
      _
    // Predicated region
    $region6: #{lstm_attn_decoder.1} parent=1 // pred_check
      _
    $region7: #{lstm_attn_decoder.1} parent=1 // pred_check_branch
      %26 = sbr.rel (0) target = $region9
    $region8: #{lstm_attn_decoder.1} parent=1 // pred_region
      _
    $region9: #{lstm_attn_decoder.1} parent=1 // pred_fallthru
      _
    // Predicated region
    $region10: #{lstm_attn_decoder.1} parent=1 // pred_check
      _
    $region11: #{lstm_attn_decoder.1} parent=1 // pred_check_branch
      %28 = sbr.rel (0) target = $region13
    $region12: #{lstm_attn_decoder.1} parent=1 // pred_region
      _
    $region13: #{lstm_attn_decoder.1} parent=1 // pred_fallthru
      _
    // Predicated region
    $region14: #{lstm_attn_decoder.1} parent=1 // pred_check
      _
    $region15: #{lstm_attn_decoder.1} parent=1 // pred_check_branch
      %30 = sbr.rel (0) target = $region17
    $region16: #{lstm_attn_decoder.1} parent=1 // pred_region
      _
    $region17: #{lstm_attn_decoder.1} parent=1 // pred_fallthru
      _
    // Predicated region
    $region18: #{lstm_attn_decoder.1} parent=1 // pred_check
      _
    $region19: #{lstm_attn_decoder.1} parent=1 // pred_check_branch
      %32 = sbr.rel (0) target = $region21
    $region20: #{lstm_attn_decoder.1} parent=1 // pred_region
      _
    $region21: #{lstm_attn_decoder.1} parent=1 // pred_fallthru
      _
    // Predicated region
    $region22: #{lstm_attn_decoder.1} parent=1 // pred_check
      _
    $region23: #{lstm_attn_decoder.1} parent=1 // pred_check_branch
      %34 = sbr.rel (0) target = $region25
    $region24: #{lstm_attn_decoder.1} parent=1 // pred_region
      _
    $region25: #{lstm_attn_decoder.1} parent=1 // pred_fallthru
      _
    // Predicated region
    $region26: #{lstm_attn_decoder.1} parent=1 // pred_check
      _
    $region27: #{lstm_attn_decoder.1} parent=1 // pred_check_branch
      %36 = sbr.rel (0) target = $region29
    $region28: #{lstm_attn_decoder.1} parent=1 // pred_region
      _
    $region29: #{lstm_attn_decoder.1} parent=1 // pred_fallthru
      _
    // Predicated region
    $region30: #{lstm_attn_decoder.1} parent=1 // pred_check
      _
    $region31: #{lstm_attn_decoder.1} parent=1 // pred_check_branch
      %38 = sbr.rel (0) target = $region33
    $region32: #{lstm_attn_decoder.1} parent=1 // pred_region
      _
    $region33: #{lstm_attn_decoder.1} parent=1 // pred_fallthru
      _
    // Predicated region
    $region34: #{lstm_attn_decoder.1} parent=1 // pred_check
      _
    $region35: #{lstm_attn_decoder.1} parent=1 // pred_check_branch
      %40 = sbr.rel (0) target = $region37
    $region36: #{lstm_attn_decoder.1} parent=1 // pred_region
      _
    $region37: #{lstm_attn_decoder.1} parent=1 // pred_fallthru
      _
    // Predicated region
    $region38: #{lstm_attn_decoder.1} parent=1 // pred_check
      _
    $region39: #{lstm_attn_decoder.1} parent=1 // pred_check_branch
      %42 = sbr.rel (0) target = $region41
    $region40: #{lstm_attn_decoder.1} parent=1 // pred_region
      _
    $region41: #{lstm_attn_decoder.1} parent=1 // pred_fallthru
      _
    // Predicated region
    $region42: #{lstm_attn_decoder.1} parent=1 // pred_check
      _
    $region43: #{lstm_attn_decoder.1} parent=1 // pred_check_branch
      %44 = sbr.rel (0) target = $region45
    $region44: #{lstm_attn_decoder.1} parent=1 // pred_region
      %s46 = ssub.s32 16, 16
      %47 = vsyncadd [#allocation3], %s46
      %s49 = sshll.u32 [#allocation2], 4
      %s50 = int_to_ptr.vmem [resolvable:$true] %s49
      %52 = dma.hbm_to_vmem [thread:$0]  %s10, 16, %s50, [#allocation3]
    $region45: #{lstm_attn_decoder.1} parent=1 // pred_fallthru
      _
    // Predicated region
    $region46: #{lstm_attn_decoder.1} parent=1 // pred_check
      _
    $region47: #{lstm_attn_decoder.1} parent=1 // pred_check_branch
      %54 = sbr.rel (0) target = $region49
    $region48: #{lstm_attn_decoder.1} parent=1 // pred_region
      _
    $region49: #{lstm_attn_decoder.1} parent=1 // pred_fallthru
      _
    // Predicated region
    $region50: #{lstm_attn_decoder.1} parent=1 // pred_check
      _
    $region51: #{lstm_attn_decoder.1} parent=1 // pred_check_branch
      %56 = sbr.rel (0) target = $region53
    $region52: #{lstm_attn_decoder.1} parent=1 // pred_region
      %s58 = ssub.s32 16, 16
      %59 = vsyncadd [#allocation6], %s58
      %s61 = sshll.u32 [#allocation5], 4
      %s62 = int_to_ptr.vmem [resolvable:$true] %s61
      %64 = dma.hbm_to_vmem [thread:$0]  %s12, 16, %s62, [#allocation6]
    $region53: #{lstm_attn_decoder.1} parent=1 // pred_fallthru
      _
    // Predicated region
    $region54: #{lstm_attn_decoder.1} parent=1 // pred_check
      _
    $region55: #{lstm_attn_decoder.1} parent=1 // pred_check_branch
      %66 = sbr.rel (0) target = $region57
    $region56: #{lstm_attn_decoder.1} parent=1 // pred_region
      %67 = dma.done [#allocation3], 16
    $region57: #{lstm_attn_decoder.1} parent=1 // pred_fallthru
      _
    // Predicated region
    $region58: #{lstm_attn_decoder.1} parent=1 // pred_check
      _
    $region59: #{lstm_attn_decoder.1} parent=1 // pred_check_branch
      %69 = sbr.rel (0) target = $region61
    $region60: #{lstm_attn_decoder.1} parent=1 // pred_region
      %70 = dma.done [#allocation6], 16
    $region61: #{lstm_attn_decoder.1} parent=1 // pred_fallthru
      _
    %v71 = vld [vmem:[%s2] sm:$0xf]
    %v72 = vld [vmem:[%s3] sm:$0xf]
    %v73 = vld [vmem:[%s4] sm:$0xff]
    %v74 = vld [vmem:[%s4 + $0x8] sm:$0xff]
    %v75 = vld [vmem:[%s4 + $0x10] sm:$0xff]
    %v76 = vld [vmem:[%s4 + $0x18] sm:$0xff]
    %v77 = vld [vmem:[%s0] sm:$0xf]
    %v78 = vlaneseq
    %v79 = vand.u32 %v78, 127
    %80 = vset.pattern.permute.xlu0 0
    %81 = vperm.xlu0 %80, %v77
    %v82 = vpop.permute.xlu0 %81
    %vm83 = vcmp.eq.s32.totalorder %v82, %v79
    %v84 = vsel %vm83, 1, 0
    %v85 = vcvt.s32.f32 %v84
    %v86 = vld [vmem:[%s1] sm:$0xff]
    %v87 = vld [vmem:[%s1 + $0x8] sm:$0xff]
    %v88 = vld [vmem:[%s1 + $0x10] sm:$0xff]
    %v89 = vld [vmem:[%s1 + $0x18] sm:$0xff]
    %v90 = vld [vmem:[%s1 + $0x20] sm:$0xff]
    %v91 = vld [vmem:[%s1 + $0x28] sm:$0xff]
    %v92 = vld [vmem:[%s1 + $0x30] sm:$0xff]
    %v93 = vld [vmem:[%s1 + $0x38] sm:$0xff]
    %v94 = vld [vmem:[%s1 + $0x40] sm:$0xff]
    %v95 = vld [vmem:[%s1 + $0x48] sm:$0xff]
    %v96 = vld [vmem:[%s1 + $0x50] sm:$0xff]
    %v97 = vld [vmem:[%s1 + $0x58] sm:$0xff]
    %v98 = vld [vmem:[%s1 + $0x60] sm:$0xff]
    %v99 = vld [vmem:[%s1 + $0x68] sm:$0xff]
    %v100 = vld [vmem:[%s1 + $0x70] sm:$0xff]
    %v101 = vld [vmem:[%s1 + $0x78] sm:$0xff]
    %102 = vmatprep.subr.mxu0 0.0
    %103 = vmatpush1.msra.mxu0 %v86
    %104 = vmatprep.subr.mxu0 0.0
    %105 = vmatpush1.msra.mxu0 %v87
    %106 = vmatprep.subr.mxu0 0.0
    %107 = vmatpush1.msra.mxu0 %v88
    %108 = vmatprep.subr.mxu0 0.0
    %109 = vmatpush1.msra.mxu0 %v89
    %110 = vmatprep.subr.mxu0 0.0
    %111 = vmatpush1.msra.mxu0 %v90
    %112 = vmatprep.subr.mxu0 0.0
    %113 = vmatpush1.msra.mxu0 %v91
    %114 = vmatprep.subr.mxu0 0.0
    %115 = vmatpush1.msra.mxu0 %v92
    %116 = vmatprep.subr.mxu0 0.0
    %117 = vmatpush1.msra.mxu0 %v93
    %118 = vmatprep.subr.mxu0 0.0
    %119 = vmatpush1.msra.mxu0 %v94
    %120 = vmatprep.subr.mxu0 0.0
    %121 = vmatpush1.msra.mxu0 %v95
    %122 = vmatprep.subr.mxu0 0.0
    %123 = vmatpush1.msra.mxu0 %v96
    %124 = vmatprep.subr.mxu0 0.0
    %125 = vmatpush1.msra.mxu0 %v97
    %126 = vmatprep.subr.mxu0 0.0
    %127 = vmatpush1.msra.mxu0 %v98
    %128 = vmatprep.subr.mxu0 0.0
    %129 = vmatpush1.msra.mxu0 %v99
    %130 = vmatprep.subr.mxu0 0.0
    %131 = vmatpush1.msra.mxu0 %v100
    %132 = vmatprep.subr.mxu0 0.0
    %133 = vmatpush1.msra.mxu0 %v101
    %134 = vmatprep.subr.mxu0 0.0
    %135 = vmatpush1.msra.mxu0 0.0
    %136 = vmatprep.subr.mxu0 0.0
    %137 = vmatpush1.msra.mxu0 0.0
    %138 = vmatprep.subr.mxu0 0.0
    %139 = vmatpush1.msra.mxu0 0.0
    %140 = vmatprep.subr.mxu0 0.0
    %141 = vmatpush1.msra.mxu0 0.0
    %142 = vmatprep.subr.mxu0 0.0
    %143 = vmatpush1.msra.mxu0 0.0
    %144 = vmatprep.subr.mxu0 0.0
    %145 = vmatpush1.msra.mxu0 0.0
    %146 = vmatprep.subr.mxu0 0.0
    %147 = vmatpush1.msra.mxu0 0.0
    %148 = vmatprep.subr.mxu0 0.0
    %149 = vmatpush1.msra.mxu0 0.0
    %150 = vmatprep.subr.mxu0 0.0
    %151 = vmatpush1.msra.mxu0 0.0
    %152 = vmatprep.subr.mxu0 0.0
    %153 = vmatpush1.msra.mxu0 0.0
    %154 = vmatprep.subr.mxu0 0.0
    %155 = vmatpush1.msra.mxu0 0.0
    %156 = vmatprep.subr.mxu0 0.0
    %157 = vmatpush1.msra.mxu0 0.0
    %158 = vmatprep.subr.mxu0 0.0
    %159 = vmatpush1.msra.mxu0 0.0
    %160 = vmatprep.subr.mxu0 0.0
    %161 = vmatpush1.msra.mxu0 0.0
    %162 = vmatprep.subr.mxu0 0.0
    %163 = vmatpush1.msra.mxu0 0.0
    %164 = vmatprep.subr.mxu0 0.0
    %165 = vmatpush1.msra.mxu0 0.0
    %166 = vmatprep.mubr.f32.mxu0 0.0
    %167 = vmatmul.mubr.f32.gmra.mrb[0].mxu0 %v85
    %v168 = vpop.f32.mrb[0].mxu0
    %v169 = vadd.f32 0.0, %v168
    %v170 = vpop.f32.mrb[0].mxu0
    %171 = vdwg.mxu0
    %v172 = vld [vmem:[%s6] sm:$0xff]
    %v173 = vld [vmem:[%s6 + $0x8] sm:$0xff]
    %v174 = vld [vmem:[%s6 + $0x10] sm:$0xff]
    %v175 = vld [vmem:[%s6 + $0x18] sm:$0xff]
    %v176 = vld [vmem:[%s6 + $0x20] sm:$0xff]
    %v177 = vld [vmem:[%s6 + $0x28] sm:$0xff]
    %v178 = vld [vmem:[%s6 + $0x30] sm:$0xff]
    %v179 = vld [vmem:[%s6 + $0x38] sm:$0xff]
    %v180 = vld [vmem:[%s5] sm:$0xff]
    %v181 = vld [vmem:[%s5 + $0x8] sm:$0xff]
    %v182 = vld [vmem:[%s5 + $0x10] sm:$0xff]
    %v183 = vld [vmem:[%s5 + $0x18] sm:$0xff]
    %v184 = vld [vmem:[%s7] sm:$0x1]
    %v186 = vlaneseq
    %v187 = vshrl.u32 %v186, 7
    %v188 = vsub.s32 0, %v187
    %v189 = vrot.slane %v184, %v188
    %vm191 = vcmask 261120
    %v193 = vsel %vm191, %v71, 0
    %195 = vmatprep.subr.mxu0 0.0
    %196 = vmatpush1.msra.mxu0 %v180
    %197 = vmatprep.subr.mxu0 0.0
    %198 = vmatpush1.msra.mxu0 %v181
    %199 = vmatprep.subr.mxu0 0.0
    %200 = vmatpush1.msra.mxu0 %v182
    %201 = vmatprep.subr.mxu0 0.0
    %202 = vmatpush1.msra.mxu0 %v183
    %203 = vmatprep.subr.mxu0 0.0
    %204 = vmatpush1.msra.mxu0 0.0
    %205 = vmatprep.subr.mxu0 0.0
    %206 = vmatpush1.msra.mxu0 0.0
    %207 = vmatprep.subr.mxu0 0.0
    %208 = vmatpush1.msra.mxu0 0.0
    %209 = vmatprep.subr.mxu0 0.0
    %210 = vmatpush1.msra.mxu0 0.0
    %211 = vmatprep.subr.mxu0 0.0
    %212 = vmatpush1.msra.mxu0 0.0
    %213 = vmatprep.subr.mxu0 0.0
    %214 = vmatpush1.msra.mxu0 0.0
    %215 = vmatprep.subr.mxu0 0.0
    %216 = vmatpush1.msra.mxu0 0.0
    %217 = vmatprep.subr.mxu0 0.0
    %218 = vmatpush1.msra.mxu0 0.0
    %219 = vmatprep.subr.mxu0 0.0
    %220 = vmatpush1.msra.mxu0 0.0
    %221 = vmatprep.subr.mxu0 0.0
    %222 = vmatpush1.msra.mxu0 0.0
    %223 = vmatprep.subr.mxu0 0.0
    %224 = vmatpush1.msra.mxu0 0.0
    %225 = vmatprep.subr.mxu0 0.0
    %226 = vmatpush1.msra.mxu0 0.0
    %227 = vmatprep.subr.mxu0 0.0
    %228 = vmatpush1.msra.mxu0 0.0
    %229 = vmatprep.subr.mxu0 0.0
    %230 = vmatpush1.msra.mxu0 0.0
    %231 = vmatprep.subr.mxu0 0.0
    %232 = vmatpush1.msra.mxu0 0.0
    %233 = vmatprep.subr.mxu0 0.0
    %234 = vmatpush1.msra.mxu0 0.0
    %235 = vmatprep.subr.mxu0 0.0
    %236 = vmatpush1.msra.mxu0 0.0
    %237 = vmatprep.subr.mxu0 0.0
    %238 = vmatpush1.msra.mxu0 0.0
    %239 = vmatprep.subr.mxu0 0.0
    %240 = vmatpush1.msra.mxu0 0.0
    %241 = vmatprep.subr.mxu0 0.0
    %242 = vmatpush1.msra.mxu0 0.0
    %243 = vmatprep.subr.mxu0 0.0
    %244 = vmatpush1.msra.mxu0 0.0
    %245 = vmatprep.subr.mxu0 0.0
    %246 = vmatpush1.msra.mxu0 0.0
    %247 = vmatprep.subr.mxu0 0.0
    %248 = vmatpush1.msra.mxu0 0.0
    %249 = vmatprep.subr.mxu0 0.0
    %250 = vmatpush1.msra.mxu0 0.0
    %251 = vmatprep.subr.mxu0 0.0
    %252 = vmatpush1.msra.mxu0 0.0
    %253 = vmatprep.subr.mxu0 0.0
    %254 = vmatpush1.msra.mxu0 0.0
    %255 = vmatprep.subr.mxu0 0.0
    %256 = vmatpush1.msra.mxu0 0.0
    %257 = vmatprep.subr.mxu0 0.0
    %258 = vmatpush1.msra.mxu0 0.0
    %259 = vmatprep.mubr.f32.mxu0 0.0
    %260 = vmatmul.mubr.f32.gmra.mrb[0].mxu0 %v193
    %v261 = vpop.f32.mrb[0].mxu0
    %v262 = vadd.f32 %v189, %v261
    %v263 = vpop.f32.mrb[0].mxu0
    %264 = vdwg.mxu0
    %v265 = vlaneseq
    %v266 = vshrl.u32 %v265, 7
    %v267 = vsub.s32 0, %v266
    %v268 = vrot.slane %v262, %v267
    %v269 = vlaneseq
    %v270 = vshrl.u32 %v269, 7
    %v271 = vsub.s32 1, %v270
    %v272 = vrot.slane %v262, %v271
    %v273 = vlaneseq
    %v274 = vshrl.u32 %v273, 7
    %v275 = vsub.s32 2, %v274
    %v276 = vrot.slane %v262, %v275
    %v277 = vlaneseq
    %v278 = vshrl.u32 %v277, 7
    %v279 = vsub.s32 3, %v278
    %v280 = vrot.slane %v262, %v279
    %vm281 = vcmask 523264
    %v283 = vsel %vm281, %v73, 0
    %v286 = vsel %vm281, %v74, 0
    %v289 = vsel %vm281, %v75, 0
    %v292 = vsel %vm281, %v76, 0
    %294 = vmatprep.subr.mxu0 0.0
    %295 = vmatpush1.msra.mxu0 %v172
    %296 = vmatprep.subr.mxu0 0.0
    %297 = vmatpush1.msra.mxu0 %v173
    %298 = vmatprep.subr.mxu0 0.0
    %299 = vmatpush1.msra.mxu0 %v174
    %300 = vmatprep.subr.mxu0 0.0
    %301 = vmatpush1.msra.mxu0 %v175
    %302 = vmatprep.subr.mxu0 0.0
    %303 = vmatpush1.msra.mxu0 %v176
    %304 = vmatprep.subr.mxu0 0.0
    %305 = vmatpush1.msra.mxu0 %v177
    %306 = vmatprep.subr.mxu0 0.0
    %307 = vmatpush1.msra.mxu0 %v178
    %308 = vmatprep.subr.mxu0 0.0
    %309 = vmatpush1.msra.mxu0 %v179
    %310 = vmatprep.subr.mxu0 0.0
    %311 = vmatpush1.msra.mxu0 0.0
    %312 = vmatprep.subr.mxu0 0.0
    %313 = vmatpush1.msra.mxu0 0.0
    %314 = vmatprep.subr.mxu0 0.0
    %315 = vmatpush1.msra.mxu0 0.0
    %316 = vmatprep.subr.mxu0 0.0
    %317 = vmatpush1.msra.mxu0 0.0
    %318 = vmatprep.subr.mxu0 0.0
    %319 = vmatpush1.msra.mxu0 0.0
    %320 = vmatprep.subr.mxu0 0.0
    %321 = vmatpush1.msra.mxu0 0.0
    %322 = vmatprep.subr.mxu0 0.0
    %323 = vmatpush1.msra.mxu0 0.0
    %324 = vmatprep.subr.mxu0 0.0
    %325 = vmatpush1.msra.mxu0 0.0
    %326 = vmatprep.subr.mxu0 0.0
    %327 = vmatpush1.msra.mxu0 0.0
    %328 = vmatprep.subr.mxu0 0.0
    %329 = vmatpush1.msra.mxu0 0.0
    %330 = vmatprep.subr.mxu0 0.0
    %331 = vmatpush1.msra.mxu0 0.0
    %332 = vmatprep.subr.mxu0 0.0
    %333 = vmatpush1.msra.mxu0 0.0
    %334 = vmatprep.subr.mxu0 0.0
    %335 = vmatpush1.msra.mxu0 0.0
    %336 = vmatprep.subr.mxu0 0.0
    %337 = vmatpush1.msra.mxu0 0.0
    %338 = vmatprep.subr.mxu0 0.0
    %339 = vmatpush1.msra.mxu0 0.0
    %340 = vmatprep.subr.mxu0 0.0
    %341 = vmatpush1.msra.mxu0 0.0
    %342 = vmatprep.subr.mxu0 0.0
    %343 = vmatpush1.msra.mxu0 0.0
    %344 = vmatprep.subr.mxu0 0.0
    %345 = vmatpush1.msra.mxu0 0.0
    %346 = vmatprep.subr.mxu0 0.0
    %347 = vmatpush1.msra.mxu0 0.0
    %348 = vmatprep.subr.mxu0 0.0
    %349 = vmatpush1.msra.mxu0 0.0
    %350 = vmatprep.subr.mxu0 0.0
    %351 = vmatpush1.msra.mxu0 0.0
    %352 = vmatprep.subr.mxu0 0.0
    %353 = vmatpush1.msra.mxu0 0.0
    %354 = vmatprep.subr.mxu0 0.0
    %355 = vmatpush1.msra.mxu0 0.0
    %356 = vmatprep.subr.mxu0 0.0
    %357 = vmatpush1.msra.mxu0 0.0
    %358 = vmatprep.mubr.f32.mxu0 0.0
    %359 = vmatmul.mubr.f32.gmra.mrb[0].mxu0 %v283
    %v360 = vpop.f32.mrb[0].mxu0
    %v361 = vadd.f32 %v268, %v360
    %v362 = vpop.f32.mrb[0].mxu0
    %363 = vmatprep.mubr.f32.mxu0 0.0
    %364 = vmatmul.mubr.f32.gmra.mrb[0].mxu0 %v286
    %v365 = vpop.f32.mrb[0].mxu0
    %v366 = vadd.f32 %v272, %v365
    %v367 = vpop.f32.mrb[0].mxu0
    %368 = vmatprep.mubr.f32.mxu0 0.0
    %369 = vmatmul.mubr.f32.gmra.mrb[0].mxu0 %v289
    %v370 = vpop.f32.mrb[0].mxu0
    %v371 = vadd.f32 %v276, %v370
    %v372 = vpop.f32.mrb[0].mxu0
    %373 = vmatprep.mubr.f32.mxu0 0.0
    %374 = vmatmul.mubr.f32.gmra.mrb[0].mxu0 %v292
    %v375 = vpop.f32.mrb[0].mxu0
    %v376 = vadd.f32 %v280, %v375
    %v377 = vpop.f32.mrb[0].mxu0
    %378 = vdwg.mxu0
    %v379 = vtanh.pop %v361
    %v380 = vtanh.pop %v366
    %v381 = vtanh.pop %v371
    %v382 = vtanh.pop %v376
    %v383 = vld [vmem:[%s8] sm:$0x1]
    %v385 = vlaneseq
    %v386 = vshrl.u32 %v385, 7
    %v387 = vsub.s32 0, %v386
    %v388 = vrot.slane %v383, %v387
    %v390 = vmul.f32 %v379, %v388
    %v391 = vmul.f32 %v380, %v388
    %v392 = vmul.f32 %v381, %v388
    %v393 = vmul.f32 %v382, %v388
    %v394 = vsel %vm191, %v390, 0.0
    %395 = vadd.xlane.f32.xlu0 %v394
    %v396 = vpop.xlane.xlu0 %395
    %v397 = vsel %vm191, %v391, 0.0
    %398 = vadd.xlane.f32.xlu0 %v397
    %v399 = vpop.xlane.xlu0 %398
    %v400 = vsel %vm191, %v392, 0.0
    %401 = vadd.xlane.f32.xlu0 %v400
    %v402 = vpop.xlane.xlu0 %401
    %v403 = vsel %vm191, %v393, 0.0
    %404 = vadd.xlane.f32.xlu0 %v403
    %v405 = vpop.xlane.xlu0 %404
    %v406 = vmax.f32 %v396, %v399
    %v407 = vmax.f32 %v402, %v405
    %v408 = vmax.f32 %v406, %v407
    %v409 = vrot.slane %v408, 4
    %v410 = vmax.f32 %v408, %v409
    %v411 = vrot.slane %v410, 2
    %v412 = vmax.f32 %v410, %v411
    %v413 = vrot.slane %v412, 1
    %v414 = vmax.f32 %v412, %v413
    %v415 = vsub.f32 %v396, %v414
    %v416 = vsub.f32 %v399, %v414
    %v417 = vsub.f32 %v402, %v414
    %v418 = vsub.f32 %v405, %v414
    %v419 = vmul.f32 %v415, 1.442695
    %v420 = vpow.pop %v419
    %v421 = vmul.f32 %v416, 1.442695
    %v422 = vpow.pop %v421
    %v423 = vmul.f32 %v417, 1.442695
    %v424 = vpow.pop %v423
    %v425 = vmul.f32 %v418, 1.442695
    %v426 = vpow.pop %v425
    %v427 = vmul.f32 %v420, %v73
    %v428 = vsel %vm281, %v427, 0.0
    %v429 = vrot.slane %v428, 4
    %v430 = vadd.f32 %v428, %v429
    %v431 = vrot.slane %v430, 2
    %v432 = vadd.f32 %v430, %v431
    %v433 = vrot.slane %v432, 1
    %v434 = vadd.f32 %v432, %v433
    %v435 = vrot.slane %v420, 4
    %v436 = vadd.f32 %v420, %v435
    %v437 = vrot.slane %v436, 2
    %v438 = vadd.f32 %v436, %v437
    %v439 = vrot.slane %v438, 1
    %v440 = vadd.f32 %v438, %v439
    %v441 = vrcp.pop %v440
    %v442 = vmul.f32 %v434, %v441
    %v443 = vmul.f32 %v422, %v74
    %v444 = vsel %vm281, %v443, 0.0
    %v445 = vrot.slane %v444, 4
    %v446 = vadd.f32 %v444, %v445
    %v447 = vrot.slane %v446, 2
    %v448 = vadd.f32 %v446, %v447
    %v449 = vrot.slane %v448, 1
    %v450 = vadd.f32 %v448, %v449
    %v451 = vrot.slane %v422, 4
    %v452 = vadd.f32 %v422, %v451
    %v453 = vrot.slane %v452, 2
    %v454 = vadd.f32 %v452, %v453
    %v455 = vrot.slane %v454, 1
    %v456 = vadd.f32 %v454, %v455
    %v457 = vrcp.pop %v456
    %v458 = vmul.f32 %v450, %v457
    %v459 = vmul.f32 %v424, %v75
    %v460 = vsel %vm281, %v459, 0.0
    %v461 = vrot.slane %v460, 4
    %v462 = vadd.f32 %v460, %v461
    %v463 = vrot.slane %v462, 2
    %v464 = vadd.f32 %v462, %v463
    %v465 = vrot.slane %v464, 1
    %v466 = vadd.f32 %v464, %v465
    %v467 = vrot.slane %v424, 4
    %v468 = vadd.f32 %v424, %v467
    %v469 = vrot.slane %v468, 2
    %v470 = vadd.f32 %v468, %v469
    %v471 = vrot.slane %v470, 1
    %v472 = vadd.f32 %v470, %v471
    %v473 = vrcp.pop %v472
    %v474 = vmul.f32 %v466, %v473
    %v475 = vmul.f32 %v426, %v76
    %v476 = vsel %vm281, %v475, 0.0
    %v477 = vrot.slane %v476, 4
    %v478 = vadd.f32 %v476, %v477
    %v479 = vrot.slane %v478, 2
    %v480 = vadd.f32 %v478, %v479
    %v481 = vrot.slane %v480, 1
    %v482 = vadd.f32 %v480, %v481
    %v483 = vrot.slane %v426, 4
    %v484 = vadd.f32 %v426, %v483
    %v485 = vrot.slane %v484, 2
    %v486 = vadd.f32 %v484, %v485
    %v487 = vrot.slane %v486, 1
    %v488 = vadd.f32 %v486, %v487
    %v489 = vrcp.pop %v488
    %v490 = vmul.f32 %v482, %v489
    %vm491 = vcmask 1040384
    %v492 = vsel %vm491, %v442, %v458
    %vm493 = vcmask 1041408
    %v494 = vsel %vm493, %v492, %v474
    %vm495 = vcmask 1042432
    %v496 = vsel %vm495, %v494, %v490
    %498 = vrot.lane.b32.xlu0 %v496, 32
    %v499 = vpop.permute.xlu0 %498
    %501 = vrot.lane.b32.xlu0 %v71, 96
    %v502 = vpop.permute.xlu0 %501
    %v504 = vsel %vm191, %v169, %v499
    %vm505 = vcmask 785408
    %v506 = vsel %vm505, %v504, %v502
    %v507 = vld [vmem:[%s9] sm:$0xff]
    %v508 = vld [vmem:[%s9 + $0x8] sm:$0xff]
    %v509 = vld [vmem:[%s9 + $0x10] sm:$0xff]
    %v510 = vld [vmem:[%s9 + $0x18] sm:$0xff]
    %v511 = vld [vmem:[%s9 + $0x20] sm:$0xff]
    %v512 = vld [vmem:[%s9 + $0x28] sm:$0xff]
    %v513 = vld [vmem:[%s9 + $0x30] sm:$0xff]
    %v514 = vld [vmem:[%s9 + $0x38] sm:$0xff]
    %v515 = vld [vmem:[%s9 + $0x40] sm:$0xff]
    %v516 = vld [vmem:[%s9 + $0x48] sm:$0xff]
    %v517 = vld [vmem:[%s9 + $0x50] sm:$0xff]
    %v518 = vld [vmem:[%s9 + $0x58] sm:$0xff]
    %v519 = vld [vmem:[%s9 + $0x60] sm:$0xff]
    %v520 = vld [vmem:[%s9 + $0x68] sm:$0xff]
    %v521 = vld [vmem:[%s9 + $0x70] sm:$0xff]
    %v522 = vld [vmem:[%s9 + $0x78] sm:$0xff]
    %v523 = vld [vmem:[#allocation2] sm:$0x1]
    %v525 = vlaneseq
    %v526 = vshrl.u32 %v525, 7
    %v527 = vsub.s32 0, %v526
    %v528 = vrot.slane %v523, %v527
    %530 = vmatprep.subr.mxu0 0.0
    %531 = vmatpush1.msra.mxu0 %v507
    %532 = vmatprep.subr.mxu0 0.0
    %533 = vmatpush1.msra.mxu0 %v508
    %534 = vmatprep.subr.mxu0 0.0
    %535 = vmatpush1.msra.mxu0 %v509
    %536 = vmatprep.subr.mxu0 0.0
    %537 = vmatpush1.msra.mxu0 %v510
    %538 = vmatprep.subr.mxu0 0.0
    %539 = vmatpush1.msra.mxu0 %v511
    %540 = vmatprep.subr.mxu0 0.0
    %541 = vmatpush1.msra.mxu0 %v512
    %542 = vmatprep.subr.mxu0 0.0
    %543 = vmatpush1.msra.mxu0 %v513
    %544 = vmatprep.subr.mxu0 0.0
    %545 = vmatpush1.msra.mxu0 %v514
    %546 = vmatprep.subr.mxu0 0.0
    %547 = vmatpush1.msra.mxu0 %v515
    %548 = vmatprep.subr.mxu0 0.0
    %549 = vmatpush1.msra.mxu0 %v516
    %550 = vmatprep.subr.mxu0 0.0
    %551 = vmatpush1.msra.mxu0 %v517
    %552 = vmatprep.subr.mxu0 0.0
    %553 = vmatpush1.msra.mxu0 %v518
    %554 = vmatprep.subr.mxu0 0.0
    %555 = vmatpush1.msra.mxu0 %v519
    %556 = vmatprep.subr.mxu0 0.0
    %557 = vmatpush1.msra.mxu0 %v520
    %558 = vmatprep.subr.mxu0 0.0
    %559 = vmatpush1.msra.mxu0 %v521
    %560 = vmatprep.subr.mxu0 0.0
    %561 = vmatpush1.msra.mxu0 %v522
    %562 = vmatprep.subr.mxu0 0.0
    %563 = vmatpush1.msra.mxu0 0.0
    %564 = vmatprep.subr.mxu0 0.0
    %565 = vmatpush1.msra.mxu0 0.0
    %566 = vmatprep.subr.mxu0 0.0
    %567 = vmatpush1.msra.mxu0 0.0
    %568 = vmatprep.subr.mxu0 0.0
    %569 = vmatpush1.msra.mxu0 0.0
    %570 = vmatprep.subr.mxu0 0.0
    %571 = vmatpush1.msra.mxu0 0.0
    %572 = vmatprep.subr.mxu0 0.0
    %573 = vmatpush1.msra.mxu0 0.0
    %574 = vmatprep.subr.mxu0 0.0
    %575 = vmatpush1.msra.mxu0 0.0
    %576 = vmatprep.subr.mxu0 0.0
    %577 = vmatpush1.msra.mxu0 0.0
    %578 = vmatprep.subr.mxu0 0.0
    %579 = vmatpush1.msra.mxu0 0.0
    %580 = vmatprep.subr.mxu0 0.0
    %581 = vmatpush1.msra.mxu0 0.0
    %582 = vmatprep.subr.mxu0 0.0
    %583 = vmatpush1.msra.mxu0 0.0
    %584 = vmatprep.subr.mxu0 0.0
    %585 = vmatpush1.msra.mxu0 0.0
    %586 = vmatprep.subr.mxu0 0.0
    %587 = vmatpush1.msra.mxu0 0.0
    %588 = vmatprep.subr.mxu0 0.0
    %589 = vmatpush1.msra.mxu0 0.0
    %590 = vmatprep.subr.mxu0 0.0
    %591 = vmatpush1.msra.mxu0 0.0
    %592 = vmatprep.subr.mxu0 0.0
    %593 = vmatpush1.msra.mxu0 0.0
    %594 = vmatprep.mubr.f32.mxu0 0.0
    %595 = vmatmul.mubr.f32.gmra.mrb[0].mxu0 %v506
    %v596 = vpop.f32.mrb[0].mxu0
    %v597 = vadd.f32 %v528, %v596
    %v598 = vpop.f32.mrb[0].mxu0
    %599 = vdwg.mxu0
    %v600 = vxor.u32 %v597, 2147483648
    %v601 = vmul.f32 %v600, 1.442695
    %v602 = vpow.pop %v601
    %v603 = vadd.f32 %v602, 1.0
    %v604 = vrcp.pop %v603
    %v605 = vmul.f32 1.0, %v604
    %v606 = vtanh.pop %v597
    %608 = vrot.lane.b32.xlu0 %v72, 32
    %v609 = vpop.permute.xlu0 %608
    %v611 = vmul.f32 %v605, %v609
    %613 = vrot.lane.b32.xlu0 %v606, 64
    %v614 = vpop.permute.xlu0 %613
    %v616 = vmul.f32 %v605, %v614
    %618 = vrot.lane.b32.xlu0 %v616, 32
    %v619 = vpop.permute.xlu0 %618
    %v621 = vadd.f32 %v611, %v619
    %v622 = vtanh.pop %v621
    %624 = vrot.lane.b32.xlu0 %v622, 64
    %v625 = vpop.permute.xlu0 %624
    %v627 = vmul.f32 %v605, %v625
    %v628 = vld [vmem:[%s11] sm:$0xff]
    %v629 = vld [vmem:[%s11 + $0x8] sm:$0xff]
    %v630 = vld [vmem:[%s11 + $0x10] sm:$0xff]
    %v631 = vld [vmem:[%s11 + $0x18] sm:$0xff]
    %v632 = vld [vmem:[#allocation5] sm:$0x1]
    %v634 = vlaneseq
    %v635 = vshrl.u32 %v634, 7
    %v636 = vsub.s32 0, %v635
    %v637 = vrot.slane %v632, %v636
    %640 = vrot.lane.b32.xlu0 %v627, 32
    %v641 = vpop.permute.xlu0 %640
    %v642 = vsel %vm191, %v641, 0
    %644 = vmatprep.subr.mxu0 0.0
    %645 = vmatpush1.msra.mxu0 %v628
    %646 = vmatprep.subr.mxu0 0.0
    %647 = vmatpush1.msra.mxu0 %v629
    %648 = vmatprep.subr.mxu0 0.0
    %649 = vmatpush1.msra.mxu0 %v630
    %650 = vmatprep.subr.mxu0 0.0
    %651 = vmatpush1.msra.mxu0 %v631
    %652 = vmatprep.subr.mxu0 0.0
    %653 = vmatpush1.msra.mxu0 0.0
    %654 = vmatprep.subr.mxu0 0.0
    %655 = vmatpush1.msra.mxu0 0.0
    %656 = vmatprep.subr.mxu0 0.0
    %657 = vmatpush1.msra.mxu0 0.0
    %658 = vmatprep.subr.mxu0 0.0
    %659 = vmatpush1.msra.mxu0 0.0
    %660 = vmatprep.subr.mxu0 0.0
    %661 = vmatpush1.msra.mxu0 0.0
    %662 = vmatprep.subr.mxu0 0.0
    %663 = vmatpush1.msra.mxu0 0.0
    %664 = vmatprep.subr.mxu0 0.0
    %665 = vmatpush1.msra.mxu0 0.0
    %666 = vmatprep.subr.mxu0 0.0
    %667 = vmatpush1.msra.mxu0 0.0
    %668 = vmatprep.subr.mxu0 0.0
    %669 = vmatpush1.msra.mxu0 0.0
    %670 = vmatprep.subr.mxu0 0.0
    %671 = vmatpush1.msra.mxu0 0.0
    %672 = vmatprep.subr.mxu0 0.0
    %673 = vmatpush1.msra.mxu0 0.0
    %674 = vmatprep.subr.mxu0 0.0
    %675 = vmatpush1.msra.mxu0 0.0
    %676 = vmatprep.subr.mxu0 0.0
    %677 = vmatpush1.msra.mxu0 0.0
    %678 = vmatprep.subr.mxu0 0.0
    %679 = vmatpush1.msra.mxu0 0.0
    %680 = vmatprep.subr.mxu0 0.0
    %681 = vmatpush1.msra.mxu0 0.0
    %682 = vmatprep.subr.mxu0 0.0
    %683 = vmatpush1.msra.mxu0 0.0
    %684 = vmatprep.subr.mxu0 0.0
    %685 = vmatpush1.msra.mxu0 0.0
    %686 = vmatprep.subr.mxu0 0.0
    %687 = vmatpush1.msra.mxu0 0.0
    %688 = vmatprep.subr.mxu0 0.0
    %689 = vmatpush1.msra.mxu0 0.0
    %690 = vmatprep.subr.mxu0 0.0
    %691 = vmatpush1.msra.mxu0 0.0
    %692 = vmatprep.subr.mxu0 0.0
    %693 = vmatpush1.msra.mxu0 0.0
    %694 = vmatprep.subr.mxu0 0.0
    %695 = vmatpush1.msra.mxu0 0.0
    %696 = vmatprep.subr.mxu0 0.0
    %697 = vmatpush1.msra.mxu0 0.0
    %698 = vmatprep.subr.mxu0 0.0
    %699 = vmatpush1.msra.mxu0 0.0
    %700 = vmatprep.subr.mxu0 0.0
    %701 = vmatpush1.msra.mxu0 0.0
    %702 = vmatprep.subr.mxu0 0.0
    %703 = vmatpush1.msra.mxu0 0.0
    %704 = vmatprep.subr.mxu0 0.0
    %705 = vmatpush1.msra.mxu0 0.0
    %706 = vmatprep.subr.mxu0 0.0
    %707 = vmatpush1.msra.mxu0 0.0
    %708 = vmatprep.mubr.f32.mxu0 0.0
    %709 = vmatmul.mubr.f32.gmra.mrb[0].mxu0 %v642
    %v710 = vpop.f32.mrb[0].mxu0
    %v711 = vadd.f32 %v637, %v710
    %v712 = vpop.f32.mrb[0].mxu0
    %713 = vdwg.mxu0
    %v716 = vunpack.c.l.s4 1966171168
    %v717 = vunpack.c.0.s8 %v716
    %v718 = vlaneseq
    %v719 = vshrl.u32 %v718, 7
    %v720 = vsub.s32 %v717, %v719
    %v721 = vrot.slane %v711, %v720
    %v722 = vcombine.high %v721, %v721
    %v724 = vunpack.c.l.s4 1966171168
    %v725 = vunpack.c.0.s8 %v724
    %v726 = vlaneseq
    %v727 = vshrl.u32 %v726, 7
    %v728 = vsub.s32 %v725, %v727
    %v729 = vrot.slane %v721, %v728
    %v731 = vunpack.c.l.s4 1966171168
    %v732 = vunpack.c.0.s8 %v731
    %v733 = vlaneseq
    %v734 = vshrl.u32 %v733, 7
    %v735 = vsub.s32 %v732, %v734
    %v736 = vrot.slane %v722, %v735
    %v737 = vcombine.high %v729, %v729
    %v738 = vcombine.high %v736, %v736
    %743 = vst [vmem:[#allocation7] sm:$0x1] %v729
    %744 = vst [vmem:[#allocation7 + $0x1] sm:$0x1] %v736
    %745 = vst [vmem:[#allocation7 + $0x2] sm:$0x1] %v737
    %746 = vst [vmem:[#allocation7 + $0x3] sm:$0x1] %v738
    %vm748 = vcmask 257024
    %749 = vst.msk [vmem:[%s14] sm:$0xf] %vm748, %v641
    %751 = vrot.lane.b32.xlu0 %v621, 96
    %v752 = vpop.permute.xlu0 %751
    %s754 = scalar_lea.vmem %s14, 4
    %755 = vst.msk [vmem:[%s754] sm:$0xf] %vm748, %v752
    // Predicated region
    $region62: #{lstm_attn_decoder.1} parent=1 // pred_check
      _
    $region63: #{lstm_attn_decoder.1} parent=1 // pred_check_branch
      %757 = sbr.rel (0) target = $region65
    $region64: #{lstm_attn_decoder.1} parent=1 // pred_region
      %s759 = ssub.s32 64, 64
      %760 = vsyncadd [#allocation4], %s759
      %s761 = sshll.u32 [#allocation7], 4
      %s762 = int_to_ptr.vmem [resolvable:$true] %s761
      %767 = dma.vmem_to_hbm [thread:$0]  %s762, 64, %s13, [#allocation4], 16, 16, 1
    $region65: #{lstm_attn_decoder.1} parent=1 // pred_fallthru
      _
    // Predicated region
    $region66: #{lstm_attn_decoder.1} parent=1 // pred_check
      _
    $region67: #{lstm_attn_decoder.1} parent=1 // pred_check_branch
      %769 = sbr.rel (0) target = $region69
    $region68: #{lstm_attn_decoder.1} parent=1 // pred_region
      _
    $region69: #{lstm_attn_decoder.1} parent=1 // pred_fallthru
      _
    // Predicated region
    $region70: #{lstm_attn_decoder.1} parent=1 // pred_check
      _
    $region71: #{lstm_attn_decoder.1} parent=1 // pred_check_branch
      %771 = sbr.rel (0) target = $region73
    $region72: #{lstm_attn_decoder.1} parent=1 // pred_region
      %772 = dma.done [#allocation4], 64
    $region73: #{lstm_attn_decoder.1} parent=1 // pred_fallthru
      _
    // Predicated region
    $region74: #{lstm_attn_decoder.1} parent=1 // pred_check
      _
    $region75: #{lstm_attn_decoder.1} parent=1 // pred_check_branch
      %774 = sbr.rel (0) target = $region77
    $region76: #{lstm_attn_decoder.1} parent=1 // pred_region
      _
    $region77: #{lstm_attn_decoder.1} parent=1 // pred_fallthru
      _
    %775 = vsyncpa [#allocation3], 1
    %776 = vsyncpa [#allocation6], 1
    %777 = vsyncpa [#allocation4], 1

</llo_original>
